<compile_context>
chip_gen: v5e
topology: v5e:2x2
jax: 0.10.0
libtpu: 0.0.40
codegen_flags: <defaults>
</compile_context>

<pallas_src>
import jax
import jax.numpy as jnp
from jax.experimental import pallas as pl
from jax.experimental.pallas import tpu as pltpu

LANE = 128  # TPU lane width: layout minimum for padded feature dims.


# ---------------------------------------------------------------------------
# Hardware-derived padding / VMEM helpers
# ---------------------------------------------------------------------------
def _mxu_tile():
    """Preferred MXU tile width: 256 on v6e/v7x (2x256^2 MXU), else 128."""
    try:
        kind = jax.devices()[0].device_kind.lower()
    except Exception:
        return LANE
    if ("v6" in kind) or ("v7" in kind):
        return 256
    return LANE


def _pad_width(d, mxu_tile):
    """Pad a real feature dim to a lane-dense (and MXU-friendly) width."""
    base = ((d + LANE - 1) // LANE) * LANE        # layout minimum (128)
    if d >= LANE and mxu_tile > LANE:             # only widen for big dims
        return ((d + mxu_tile - 1) // mxu_tile) * mxu_tile
    return base


def _vmem_capacity_bytes():
    try:
        return int(pltpu.get_tpu_info().vmem_capacity_bytes)
    except Exception:
        return 64 << 20  # conservative (v7x per-TC capacity)


def _full_spec(shape):
    # Single full-array block (no grid); block shape == array shape satisfies
    # the TPU tiling rule for any dtype.
    nd = len(shape)
    return pl.BlockSpec(shape, lambda nd=nd: (0,) * nd)


# ---------------------------------------------------------------------------
# Fused Pallas kernel (all layers + bias + ReLU + masked softmax)
# ---------------------------------------------------------------------------
def _make_fused_wgcn_kernel(in_pad, hid_pad, out_pad, n_mid, out_feats):
    """Build the fused kernel for static padded widths and middle-layer count."""

    def conv(a, h, w, b, f_in_pad, f_out_pad):
        # Weighted graph conv: relu(A @ h @ W + b), associatively reordered so
        # the smaller feature width sits on the N x N product.
        if f_out_pad <= f_in_pad:
            xw = jnp.dot(h, w, preferred_element_type=jnp.float32)
            z = jnp.dot(a, xw.astype(jnp.bfloat16),
                        preferred_element_type=jnp.float32)
        else:
            ax = jnp.dot(a, h, preferred_element_type=jnp.float32)
            z = jnp.dot(ax.astype(jnp.bfloat16), w,
                        preferred_element_type=jnp.float32)
        # Bias + ReLU in f32 (ReLU after EVERY layer, incl. the last —
        # reproduces the reference's always-true branch).
        return jnp.maximum(z + b, 0.0)

    def kernel(*refs):
        if n_mid > 0:
            (a_ref, x_ref, w0_ref, b0_ref, wm_ref, bm_ref,
             wl_ref, bl_ref, o_ref) = refs
        else:
            (a_ref, x_ref, w0_ref, b0_ref, wl_ref, bl_ref, o_ref) = refs

        a = a_ref[...]                                # [N, N]       bf16
        h = x_ref[...]                                # [N, in_pad]  bf16

        # First layer: in_pad -> hid_pad.
        z = conv(a, h, w0_ref[...], b0_ref[...], in_pad, hid_pad)
        h = z.astype(jnp.bfloat16)                    # [N, hid_pad] bf16

        # Homogeneous middle layers (hid_pad -> hid_pad) via fori_loop over the
        # stacked weights: bounds live ranges per layer for deep stacks.
        if n_mid > 0:
            def body(l, h_c):
                w_l = wm_ref[l]                       # [hid_pad, hid_pad] bf16
                b_l = bm_ref[l]                       # [1, hid_pad]       f32
                z_l = conv(a, h_c, w_l, b_l, hid_pad, hid_pad)
                return z_l.astype(jnp.bfloat16)
            h = jax.lax.fori_loop(0, n_mid, body, h)

        # Last layer: hid_pad -> out_pad (kept in f32 for the softmax).
        z = conv(a, h, wl_ref[...], bl_ref[...], hid_pad, out_pad)

        # Row softmax over the feature dim (dim=1).  Mask the zero-padded
        # lanes so they contribute exp(.) = 0 and real columns sum to 1.
        col = jax.lax.broadcasted_iota(jnp.int32, z.shape, 1)
        logits = jnp.where(col < out_feats, z, -1e30)
        m = jnp.max(logits, axis=1, keepdims=True)
        e = jnp.exp(logits - m)
        denom = jnp.sum(e, axis=1, keepdims=True)
        o_ref[...] = (e * pl.reciprocal(denom, approx=True)).astype(o_ref.dtype)

    return kernel


# ---------------------------------------------------------------------------
# Wrapper
# ---------------------------------------------------------------------------
def wgcn_forward(adj_w, in_feat, params, out_dtype=jnp.float32):
    """Full wGCN forward pass in one fused Pallas kernel.

    adj_w   : [N, N] dense weighted adjacency (graph + edge weights g.edata['W'])
    in_feat : [N, in_feats] node features
    params  : list of (W [f_in, f_out], b [f_out]) per WGraphConv layer,
              following the module's structure in->hid, (hid->hid)*, hid->out
    out_dtype: dtype of the HBM output slab (bf16 halves the only writeback).
    """
    n = int(adj_w.shape[0])
    in_feats = int(in_feat.shape[1])
    assert len(params) >= 2, "wGCN always has at least two WGraphConv layers"

    w0, b0 = params[0]
    wl, bl = params[-1]
    mids = params[1:-1]
    hid_feats = int(w0.shape[1])
    out_feats = int(wl.shape[1])
    n_mid = len(mids)
    for (w, _) in mids:
        assert tuple(w.shape) == (hid_feats, hid_feats), \
            "middle wGCN layers must be hid_feat -> hid_feat"

    # Per-layer padded widths (generation-dependent MXU tile for dims >= 128).
    mxu_tile = _mxu_tile()
    in_pad = _pad_width(in_feats, mxu_tile)
    hid_pad = _pad_width(hid_feats, mxu_tile)
    out_pad = _pad_width(out_feats, mxu_tile)

    # bf16 MXU operands, zero-padded to their own lane-dense widths.
    a_b = adj_w.astype(jnp.bfloat16)
    x_p = jnp.zeros((n, in_pad), jnp.bfloat16)
    x_p = x_p.at[:, :in_feats].set(in_feat.astype(jnp.bfloat16))

    def pad_w(w, rp, cp):
        out = jnp.zeros((rp, cp), jnp.bfloat16)
        return out.at[: w.shape[0], : w.shape[1]].set(w.astype(jnp.bfloat16))

    def pad_b(b, cp):
        out = jnp.zeros((1, cp), jnp.float32)
        return out.at[0, : b.shape[0]].set(b.astype(jnp.float32))

    w0_p = pad_w(w0, in_pad, hid_pad)
    b0_p = pad_b(b0, hid_pad)
    wl_p = pad_w(wl, hid_pad, out_pad)
    bl_p = pad_b(bl, out_pad)

    operands = [a_b, x_p, w0_p, b0_p]
    if n_mid > 0:
        wm_p = jnp.stack([pad_w(w, hid_pad, hid_pad) for (w, _) in mids])
        bm_p = jnp.stack([pad_b(b, hid_pad) for (_, b) in mids])
        operands += [wm_p, bm_p]
    operands += [wl_p, bl_p]

    # Advisory cost estimate (per-layer padded shapes, cheaper association).
    def assoc_flops(f_in, f_out):
        if f_out <= f_in:
            return 2 * n * f_in * f_out + 2 * n * n * f_out
        return 2 * n * n * f_in + 2 * n * f_in * f_out

    out_isize = jnp.dtype(out_dtype).itemsize
    flops = (assoc_flops(in_pad, hid_pad)
             + n_mid * assoc_flops(hid_pad, hid_pad)
             + assoc_flops(hid_pad, out_pad))
    transcendentals = n * out_pad + n                     # exp + approx recip
    bytes_accessed = (n * n * 2 + n * in_pad * 2
                      + in_pad * hid_pad * 2 + hid_pad * 4
                      + n_mid * (hid_pad * hid_pad * 2 + hid_pad * 4)
                      + hid_pad * out_pad * 2 + out_pad * 4
                      + n * out_pad * out_isize)
    cost = pl.CostEstimate(flops=int(flops),
                           transcendentals=int(transcendentals),
                           bytes_accessed=int(bytes_accessed))

    # Explicit VMEM budget (operands x2 for buffering + live intermediates),
    # capped at this generation's physical VMEM (v7x 64 MiB vs v6e 128 MiB).
    resident = 2 * (n * n * 2 + n * in_pad * 2
                    + in_pad * hid_pad * 2 + hid_pad * 4
                    + n_mid * (hid_pad * hid_pad * 2 + hid_pad * 4)
                    + hid_pad * out_pad * 2 + out_pad * 4
                    + n * out_pad * out_isize)
    resident += n * hid_pad * (4 + 2) + n * max(hid_pad, out_pad) * 4
    vmem_cap = _vmem_capacity_bytes()
    vmem_limit = int(min(max(int(1.5 * resident), 32 << 20), vmem_cap))

    kernel = _make_fused_wgcn_kernel(in_pad, hid_pad, out_pad, n_mid, out_feats)
    in_specs = [_full_spec(op.shape) for op in operands]

    out_padded = pl.pallas_call(
        kernel,
        out_shape=jax.ShapeDtypeStruct((n, out_pad), out_dtype),
        in_specs=in_specs,
        out_specs=_full_spec((n, out_pad)),
        cost_estimate=cost,
        compiler_params=pltpu.CompilerParams(vmem_limit_bytes=vmem_limit),
    )(*operands)

    return out_padded[:, :out_feats]


def init_wgcn_params(key, in_feats, hid_feat, out_feats, num_hlayers=0):
    """Deterministic parameter init matching the module's layer structure."""
    dims = [in_feats, hid_feat] + [hid_feat] * num_hlayers + [out_feats]
    params = []
    for i in range(len(dims) - 1):
        key, kw, kb = jax.random.split(key, 3)
        fan_in, fan_out = dims[i], dims[i + 1]
        scale = 1.0 / jnp.sqrt(jnp.float32(fan_in))
        w = jax.random.uniform(kw, (fan_in, fan_out), jnp.float32, -scale, scale)
        b = jax.random.uniform(kb, (fan_out,), jnp.float32, -scale, scale)
        params.append((w, b))
    return params


def wgcn_reference(adj_w, in_feat, params):
    """Pure-JAX f32 reference of the same forward semantics."""
    h = in_feat
    for (w, b) in params:
        h = jnp.maximum(adj_w @ h @ w + b, 0.0)   # ReLU after every layer
    return jax.nn.softmax(h, axis=1)


# ---------------------------------------------------------------------------
# Demo
# ---------------------------------------------------------------------------
if __name__ == "__main__":
    key = jax.random.PRNGKey(0)

    N = 16           # number of graph nodes
    in_feats = 8
    hid_feat = 32
    out_feats = 4
    num_hlayers = 1  # -> 3 WGraphConv layers total

    k_adj, k_x, k_p = jax.random.split(key, 3)

    # Synthetic weighted graph: random sparse-ish adjacency with positive edge
    # weights (these play the role of g + g.edata['W']), plus self-loops.
    mask = (jax.random.uniform(k_adj, (N, N)) < 0.3).astype(jnp.float32)
    weights = jax.random.uniform(jax.random.fold_in(k_adj, 1), (N, N),
                                 jnp.float32, 0.1, 1.0)
    adj_w = mask * weights + jnp.eye(N, dtype=jnp.float32)

    in_feat = jax.random.normal(k_x, (N, in_feats), jnp.float32)

    params = init_wgcn_params(k_p, in_feats, hid_feat, out_feats, num_hlayers)

    out = wgcn_forward(adj_w, in_feat, params)
    out = jax.block_until_ready(out)

    # sanity: shape, softmax rows sum to ~1, matches f32 reference (bf16 MXU
    # operands + approx reciprocal -> loose tolerance).
    assert out.shape == (N, out_feats)
    assert bool(jnp.allclose(jnp.sum(out, axis=1), 1.0, atol=1e-2))
    ref = wgcn_reference(adj_w, in_feat, params)
    assert bool(jnp.allclose(out, ref, atol=5e-2))

    print("KERNEL_OK")
</pallas_src>

<mosaic_0001>
module attributes {stable_mosaic.version = 11 : i64} {
  func.func @kernel(%arg0: memref<16x16xbf16, #tpu.memory_space<vmem>>, %arg1: memref<16x128xbf16, #tpu.memory_space<vmem>>, %arg2: memref<128x128xbf16, #tpu.memory_space<vmem>>, %arg3: memref<1x128xf32, #tpu.memory_space<vmem>>, %arg4: memref<1x128x128xbf16, #tpu.memory_space<vmem>>, %arg5: memref<1x1x128xf32, #tpu.memory_space<vmem>>, %arg6: memref<128x128xbf16, #tpu.memory_space<vmem>>, %arg7: memref<1x128xf32, #tpu.memory_space<vmem>>, %arg8: memref<16x128xf32, #tpu.memory_space<vmem>>) attributes {dimension_semantics = [], scalar_prefetch = 0 : i64, scratch_operands = 0 : i64, tpu.core_type = #tpu.core_type<tc>} {
    %c0 = arith.constant 0 : index
    %c0_0 = arith.constant 0 : index
    %0 = vector.load %arg0[%c0, %c0_0] : memref<16x16xbf16, #tpu.memory_space<vmem>>, vector<16x16xbf16>
    %c0_1 = arith.constant 0 : index
    %c0_2 = arith.constant 0 : index
    %1 = vector.load %arg1[%c0_1, %c0_2] : memref<16x128xbf16, #tpu.memory_space<vmem>>, vector<16x128xbf16>
    %c0_3 = arith.constant 0 : index
    %c0_4 = arith.constant 0 : index
    %2 = vector.load %arg2[%c0_3, %c0_4] : memref<128x128xbf16, #tpu.memory_space<vmem>>, vector<128x128xbf16>
    %c0_5 = arith.constant 0 : index
    %c0_6 = arith.constant 0 : index
    %3 = vector.load %arg3[%c0_5, %c0_6] : memref<1x128xf32, #tpu.memory_space<vmem>>, vector<1x128xf32>
    %cst = arith.constant dense<0.000000e+00> : vector<16x128xf32>
    %4 = tpu.matmul %1, %2, %cst {dimension_numbers = #tpu.dot_dimension_numbers<[1], [0], [0], [1], [0, 0, 1, 1], [], []>} : vector<16x128xbf16>, vector<128x128xbf16>, vector<16x128xf32> -> vector<16x128xf32>
    %5 = arith.truncf %4 : vector<16x128xf32> to vector<16x128xbf16>
    %cst_7 = arith.constant dense<0.000000e+00> : vector<16x128xf32>
    %6 = tpu.matmul %0, %5, %cst_7 {dimension_numbers = #tpu.dot_dimension_numbers<[1], [0], [0], [1], [0, 0, 1, 1], [], []>} : vector<16x16xbf16>, vector<16x128xbf16>, vector<16x128xf32> -> vector<16x128xf32>
    %7 = vector.broadcast %3 : vector<1x128xf32> to vector<16x128xf32>
    %8 = arith.addf %6, %7 : vector<16x128xf32>
    %cst_8 = arith.constant 0.000000e+00 : f32
    %9 = vector.broadcast %cst_8 : f32 to vector<16x128xf32>
    %10 = arith.maximumf %8, %9 : vector<16x128xf32>
    %11 = arith.truncf %10 : vector<16x128xf32> to vector<16x128xbf16>
    %c0_i32 = arith.constant 0 : i32
    %12 = arith.index_cast %c0_i32 : i32 to index
    %c0_9 = arith.constant 0 : index
    %c0_10 = arith.constant 0 : index
    %13 = vector.load %arg4[%12, %c0_9, %c0_10] : memref<1x128x128xbf16, #tpu.memory_space<vmem>>, vector<1x128x128xbf16>
    %14 = vector.shape_cast %13 : vector<1x128x128xbf16> to vector<128x128xbf16>
    %15 = arith.index_cast %c0_i32 : i32 to index
    %c0_11 = arith.constant 0 : index
    %c0_12 = arith.constant 0 : index
    %16 = vector.load %arg5[%15, %c0_11, %c0_12] : memref<1x1x128xf32, #tpu.memory_space<vmem>>, vector<1x1x128xf32>
    %17 = vector.shape_cast %16 : vector<1x1x128xf32> to vector<1x128xf32>
    %cst_13 = arith.constant dense<0.000000e+00> : vector<16x128xf32>
    %18 = tpu.matmul %11, %14, %cst_13 {dimension_numbers = #tpu.dot_dimension_numbers<[1], [0], [0], [1], [0, 0, 1, 1], [], []>} : vector<16x128xbf16>, vector<128x128xbf16>, vector<16x128xf32> -> vector<16x128xf32>
    %19 = arith.truncf %18 : vector<16x128xf32> to vector<16x128xbf16>
    %cst_14 = arith.constant dense<0.000000e+00> : vector<16x128xf32>
    %20 = tpu.matmul %0, %19, %cst_14 {dimension_numbers = #tpu.dot_dimension_numbers<[1], [0], [0], [1], [0, 0, 1, 1], [], []>} : vector<16x16xbf16>, vector<16x128xbf16>, vector<16x128xf32> -> vector<16x128xf32>
    %21 = vector.broadcast %17 : vector<1x128xf32> to vector<16x128xf32>
    %22 = arith.addf %20, %21 : vector<16x128xf32>
    %cst_15 = arith.constant 0.000000e+00 : f32
    %23 = vector.broadcast %cst_15 : f32 to vector<16x128xf32>
    %24 = arith.maximumf %22, %23 : vector<16x128xf32>
    %25 = arith.truncf %24 : vector<16x128xf32> to vector<16x128xbf16>
    %c1_i32 = arith.constant 1 : i32
    %c0_16 = arith.constant 0 : index
    %c0_17 = arith.constant 0 : index
    %26 = vector.load %arg6[%c0_16, %c0_17] : memref<128x128xbf16, #tpu.memory_space<vmem>>, vector<128x128xbf16>
    %c0_18 = arith.constant 0 : index
    %c0_19 = arith.constant 0 : index
    %27 = vector.load %arg7[%c0_18, %c0_19] : memref<1x128xf32, #tpu.memory_space<vmem>>, vector<1x128xf32>
    %cst_20 = arith.constant dense<0.000000e+00> : vector<16x128xf32>
    %28 = tpu.matmul %25, %26, %cst_20 {dimension_numbers = #tpu.dot_dimension_numbers<[1], [0], [0], [1], [0, 0, 1, 1], [], []>} : vector<16x128xbf16>, vector<128x128xbf16>, vector<16x128xf32> -> vector<16x128xf32>
    %29 = arith.truncf %28 : vector<16x128xf32> to vector<16x128xbf16>
    %cst_21 = arith.constant dense<0.000000e+00> : vector<16x128xf32>
    %30 = tpu.matmul %0, %29, %cst_21 {dimension_numbers = #tpu.dot_dimension_numbers<[1], [0], [0], [1], [0, 0, 1, 1], [], []>} : vector<16x16xbf16>, vector<16x128xbf16>, vector<16x128xf32> -> vector<16x128xf32>
    %31 = vector.broadcast %27 : vector<1x128xf32> to vector<16x128xf32>
    %32 = arith.addf %30, %31 : vector<16x128xf32>
    %cst_22 = arith.constant 0.000000e+00 : f32
    %33 = vector.broadcast %cst_22 : f32 to vector<16x128xf32>
    %34 = arith.maximumf %32, %33 : vector<16x128xf32>
    %35 = tpu.iota {dimensions = array<i32: 1>} : vector<16x128xi32>
    %c4_i32 = arith.constant 4 : i32
    %36 = vector.broadcast %c4_i32 : i32 to vector<16x128xi32>
    %37 = arith.cmpi slt, %35, %36 : vector<16x128xi32>
    %cst_23 = arith.constant -1.000000e+30 : f32
    %38 = vector.broadcast %cst_23 : f32 to vector<16x128xf32>
    %39 = arith.select %37, %34, %38 : vector<16x128xi1>, vector<16x128xf32>
    %cst_24 = arith.constant dense<0xFF800000> : vector<16xf32>
    %40 = vector.multi_reduction <maximumf>, %39, %cst_24 [1] : vector<16x128xf32> to vector<16xf32>
    %41 = vector.shape_cast %40 : vector<16xf32> to vector<16x1xf32>
    %42 = vector.broadcast %41 : vector<16x1xf32> to vector<16x128xf32>
    %43 = arith.subf %39, %42 : vector<16x128xf32>
    %44 = math.exp %43 : vector<16x128xf32>
    %cst_25 = arith.constant dense<0.000000e+00> : vector<16xf32>
    %45 = vector.multi_reduction <add>, %44, %cst_25 [1] : vector<16x128xf32> to vector<16xf32>
    %46 = vector.shape_cast %45 : vector<16xf32> to vector<16x1xf32>
    %47 = tpu.reciprocal %46 {approx = true} : vector<16x1xf32> -> vector<16x1xf32>
    %48 = vector.broadcast %47 : vector<16x1xf32> to vector<16x128xf32>
    %49 = arith.mulf %44, %48 : vector<16x128xf32>
    %c0_26 = arith.constant 0 : index
    %c0_27 = arith.constant 0 : index
    %50 = vector.load %arg8[%c0_26, %c0_27] : memref<16x128xf32, #tpu.memory_space<vmem>>, vector<16x128xf32>
    tpu.vector_store %arg8[%c0_26, %c0_27], %49 {strides = array<i32>} : memref<16x128xf32, #tpu.memory_space<vmem>>, vector<16x128xf32>,
    return
  }
}

</mosaic_0001>

<llo_original>
// kernel: tpu_custom_call.1
$region0: #{tpu_custom_call.1}
  #allocation0 [shape = 'u32[]', space=smem, size = 0x4, offset = 0x4, fixed_abs, tag = 'smem constant byte address 0x4 - core index']
  #allocation1 [shape = 'u32[72,128]{1,0:T(1,128)}', space=vmem, size = 0x9000, scoped, tag = 'internal scratch']
  %s0 = inlined_call_operand.hbm [shape: bf16[16,16], index: 0, kind: input, shape index: {}]
  %s1 = inlined_call_operand.hbm [shape: bf16[16,128], index: 1, kind: input, shape index: {}]
  %s2 = inlined_call_operand.hbm [shape: bf16[128,128], index: 2, kind: input, shape index: {}]
  %s3 = inlined_call_operand.vmem [shape: f32[1,128], index: 3, kind: input, shape index: {}]
  %s4 = inlined_call_operand.hbm [shape: bf16[1,128,128], index: 4, kind: input, shape index: {}]
  %s5 = inlined_call_operand.vmem [shape: f32[1,1,128], index: 5, kind: input, shape index: {}]
  %s6 = inlined_call_operand.hbm [shape: bf16[128,128], index: 6, kind: input, shape index: {}]
  %s7 = inlined_call_operand.vmem [shape: f32[1,128], index: 7, kind: input, shape index: {}]
  %s8 = inlined_call_operand.hbm [shape: f32[16,128], index: 8, kind: output, shape index: {}]
  %s9 = sld [smem:[#allocation0]]
  $region62: #{tpu_custom_call.1} parent=0
    _
  %s11 = ssub.s32 1, %s9
  %s12 = scalar_select 0, %s11, %s9
  $region1: #{tpu_custom_call.1} parent=0
    #allocation2 [shape = 'u8[4096]{0}', space=vmem, size = 0x1000, scoped, tag = 'input window, operand 0, single buffered']
    #allocation3 [shape = 's32[1]{0}', space=sflag, size = 0x4, scoped, tag = 'scoped memory for tpu_custom_call.1']
    #allocation4 [shape = 's32[1]{0}', space=sflag, size = 0x4, scoped, tag = 'scoped memory for tpu_custom_call.1']
    #allocation5 [shape = 'u8[4096]{0}', space=vmem, size = 0x1000, scoped, tag = 'input window, operand 1, single buffered']
    #allocation6 [shape = 's32[1]{0}', space=sflag, size = 0x4, scoped, tag = 'scoped memory for tpu_custom_call.1']
    #allocation7 [shape = 'u8[32768]{0}', space=vmem, size = 0x8000, scoped, tag = 'input window, operand 2, single buffered']
    #allocation8 [shape = 'u8[32768]{0}', space=vmem, size = 0x8000, scoped, tag = 'input window, operand 4, single buffered']
    #allocation9 [shape = 's32[1]{0}', space=sflag, size = 0x4, scoped, tag = 'scoped memory for tpu_custom_call.1']
    #allocation10 [shape = 'u8[32768]{0}', space=vmem, size = 0x8000, scoped, tag = 'input window, operand 6, single buffered']
    #allocation11 [shape = 'u8[8192]{0}', space=vmem, size = 0x2000, scoped, tag = 'output window, operand 0, single buffered']
    %13 = vsyncpa [#allocation3], 0
    %14 = vsyncpa [#allocation6], 0
    %15 = vsyncpa [#allocation9], 0
    %16 = vsyncpa [#allocation4], 0
    // Predicated region
    $region2: #{tpu_custom_call.1} parent=1 // pred_check
      _
    $region3: #{tpu_custom_call.1} parent=1 // pred_check_branch
      %18 = sbr.rel (0) target = $region5
    $region4: #{tpu_custom_call.1} parent=1 // pred_region
      %20 = vsyncadd [#allocation3], 0
      %s21 = sshll.u32 %s0, 4
      %s22 = int_to_ptr.hbm [resolvable:$true] %s21
      %s23 = sshll.u32 [#allocation2], 4
      %s24 = int_to_ptr.vmem [resolvable:$true] %s23
      %29 = dma.hbm_to_vmem [thread:$0]  %s22, 128, %s24, [#allocation3], 64, 64, 4
    $region5: #{tpu_custom_call.1} parent=1 // pred_fallthru
      _
    // Predicated region
    $region6: #{tpu_custom_call.1} parent=1 // pred_check
      _
    $region7: #{tpu_custom_call.1} parent=1 // pred_check_branch
      %31 = sbr.rel (0) target = $region9
    $region8: #{tpu_custom_call.1} parent=1 // pred_region
      %33 = vsyncadd [#allocation6], 0
      %s34 = sshll.u32 %s1, 4
      %s35 = int_to_ptr.hbm [resolvable:$true] %s34
      %s36 = sshll.u32 [#allocation5], 4
      %s37 = int_to_ptr.vmem [resolvable:$true] %s36
      %42 = dma.hbm_to_vmem [thread:$0]  %s35, 128, %s37, [#allocation6], 64, 64, 4
    $region9: #{tpu_custom_call.1} parent=1 // pred_fallthru
      _
    // Predicated region
    $region10: #{tpu_custom_call.1} parent=1 // pred_check
      _
    $region11: #{tpu_custom_call.1} parent=1 // pred_check_branch
      %44 = sbr.rel (0) target = $region13
    $region12: #{tpu_custom_call.1} parent=1 // pred_region
      %46 = vsyncadd [#allocation6], 0
      %s47 = sshll.u32 %s2, 4
      %s48 = int_to_ptr.hbm [resolvable:$true] %s47
      %s49 = sshll.u32 [#allocation7], 4
      %s50 = int_to_ptr.vmem [resolvable:$true] %s49
      %55 = dma.hbm_to_vmem [thread:$0]  %s48, 1024, %s50, [#allocation6], 64, 64, 4
    $region13: #{tpu_custom_call.1} parent=1 // pred_fallthru
      _
    // Predicated region
    $region14: #{tpu_custom_call.1} parent=1 // pred_check
      _
    $region15: #{tpu_custom_call.1} parent=1 // pred_check_branch
      %57 = sbr.rel (0) target = $region17
    $region16: #{tpu_custom_call.1} parent=1 // pred_region
      _
    $region17: #{tpu_custom_call.1} parent=1 // pred_fallthru
      _
    // Predicated region
    $region18: #{tpu_custom_call.1} parent=1 // pred_check
      _
    $region19: #{tpu_custom_call.1} parent=1 // pred_check_branch
      %59 = sbr.rel (0) target = $region21
    $region20: #{tpu_custom_call.1} parent=1 // pred_region
      %61 = vsyncadd [#allocation9], 0
      %s62 = sshll.u32 %s4, 4
      %s63 = int_to_ptr.hbm [resolvable:$true] %s62
      %s64 = sshll.u32 [#allocation8], 4
      %s65 = int_to_ptr.vmem [resolvable:$true] %s64
      %70 = dma.hbm_to_vmem [thread:$0]  %s63, 1024, %s65, [#allocation9], 64, 64, 4
    $region21: #{tpu_custom_call.1} parent=1 // pred_fallthru
      _
    // Predicated region
    $region22: #{tpu_custom_call.1} parent=1 // pred_check
      _
    $region23: #{tpu_custom_call.1} parent=1 // pred_check_branch
      %72 = sbr.rel (0) target = $region25
    $region24: #{tpu_custom_call.1} parent=1 // pred_region
      _
    $region25: #{tpu_custom_call.1} parent=1 // pred_fallthru
      _
    // Predicated region
    $region26: #{tpu_custom_call.1} parent=1 // pred_check
      _
    $region27: #{tpu_custom_call.1} parent=1 // pred_check_branch
      %74 = sbr.rel (0) target = $region29
    $region28: #{tpu_custom_call.1} parent=1 // pred_region
      %76 = vsyncadd [#allocation9], 0
      %s77 = sshll.u32 %s6, 4
      %s78 = int_to_ptr.hbm [resolvable:$true] %s77
      %s79 = sshll.u32 [#allocation10], 4
      %s80 = int_to_ptr.vmem [resolvable:$true] %s79
      %85 = dma.hbm_to_vmem [thread:$0]  %s78, 1024, %s80, [#allocation9], 64, 64, 4
    $region29: #{tpu_custom_call.1} parent=1 // pred_fallthru
      _
    // Predicated region
    $region30: #{tpu_custom_call.1} parent=1 // pred_check
      _
    $region31: #{tpu_custom_call.1} parent=1 // pred_check_branch
      %87 = sbr.rel (0) target = $region33
    $region32: #{tpu_custom_call.1} parent=1 // pred_region
      _
    $region33: #{tpu_custom_call.1} parent=1 // pred_fallthru
      _
    // Predicated region
    $region34: #{tpu_custom_call.1} parent=1 // pred_check
      _
    $region35: #{tpu_custom_call.1} parent=1 // pred_check_branch
      %89 = sbr.rel (0) target = $region37
    $region36: #{tpu_custom_call.1} parent=1 // pred_region
      %91 = dma.done [#allocation3], 128
    $region37: #{tpu_custom_call.1} parent=1 // pred_fallthru
      _
    // Predicated region
    $region38: #{tpu_custom_call.1} parent=1 // pred_check
      _
    $region39: #{tpu_custom_call.1} parent=1 // pred_check_branch
      %93 = sbr.rel (0) target = $region41
    $region40: #{tpu_custom_call.1} parent=1 // pred_region
      %95 = dma.done [#allocation6], 128
    $region41: #{tpu_custom_call.1} parent=1 // pred_fallthru
      _
    // Predicated region
    $region42: #{tpu_custom_call.1} parent=1 // pred_check
      _
    $region43: #{tpu_custom_call.1} parent=1 // pred_check_branch
      %97 = sbr.rel (0) target = $region45
    $region44: #{tpu_custom_call.1} parent=1 // pred_region
      %99 = dma.done [#allocation6], 1024
    $region45: #{tpu_custom_call.1} parent=1 // pred_fallthru
      _
    // Predicated region
    $region46: #{tpu_custom_call.1} parent=1 // pred_check
      _
    $region47: #{tpu_custom_call.1} parent=1 // pred_check_branch
      %101 = sbr.rel (0) target = $region49
    $region48: #{tpu_custom_call.1} parent=1 // pred_region
      %103 = dma.done [#allocation9], 1024
    $region49: #{tpu_custom_call.1} parent=1 // pred_fallthru
      _
    // Predicated region
    $region50: #{tpu_custom_call.1} parent=1 // pred_check
      _
    $region51: #{tpu_custom_call.1} parent=1 // pred_check_branch
      %105 = sbr.rel (0) target = $region53
    $region52: #{tpu_custom_call.1} parent=1 // pred_region
      %107 = dma.done [#allocation9], 1024
    $region53: #{tpu_custom_call.1} parent=1 // pred_fallthru
      _
    %v109 = vld [vmem:[#allocation2] sm:$0xf]
    %v110 = vld [vmem:[#allocation2 + $0x4] sm:$0xf]
    %v111 = vld [vmem:[#allocation5] sm:$0xf]
    %v112 = vld [vmem:[#allocation5 + $0x4] sm:$0xf]
    %v113 = vld [vmem:[#allocation7] sm:$0xf]
    %v114 = vld [vmem:[#allocation7 + $0x4] sm:$0xf]
    %v115 = vld [vmem:[#allocation7 + $0x8] sm:$0xf]
    %v116 = vld [vmem:[#allocation7 + $0xc] sm:$0xf]
    %v117 = vld [vmem:[#allocation7 + $0x10] sm:$0xf]
    %v118 = vld [vmem:[#allocation7 + $0x14] sm:$0xf]
    %v119 = vld [vmem:[#allocation7 + $0x18] sm:$0xf]
    %v120 = vld [vmem:[#allocation7 + $0x1c] sm:$0xf]
    %v121 = vld [vmem:[#allocation7 + $0x20] sm:$0xf]
    %v122 = vld [vmem:[#allocation7 + $0x24] sm:$0xf]
    %v123 = vld [vmem:[#allocation7 + $0x28] sm:$0xf]
    %v124 = vld [vmem:[#allocation7 + $0x2c] sm:$0xf]
    %v125 = vld [vmem:[#allocation7 + $0x30] sm:$0xf]
    %v126 = vld [vmem:[#allocation7 + $0x34] sm:$0xf]
    %v127 = vld [vmem:[#allocation7 + $0x38] sm:$0xf]
    %v128 = vld [vmem:[#allocation7 + $0x3c] sm:$0xf]
    %v129 = vld [vmem:[%s3] sm:$0x1]
    %v132 = vunpack.c.l.b16 %v111
    %v133 = vunpack.c.l.b16 %v112
    %v134 = vpack.c.b16 %v133, %v132
    %v152 = vunpack.c.l.b16 %v113
    %v153 = vunpack.c.l.b16 %v114
    %v154 = vunpack.c.l.b16 %v115
    %v155 = vunpack.c.l.b16 %v116
    %v156 = vunpack.c.l.b16 %v117
    %v157 = vunpack.c.l.b16 %v118
    %v158 = vunpack.c.l.b16 %v119
    %v159 = vunpack.c.l.b16 %v120
    %v160 = vunpack.c.l.b16 %v121
    %v161 = vunpack.c.l.b16 %v122
    %v162 = vunpack.c.l.b16 %v123
    %v163 = vunpack.c.l.b16 %v124
    %v164 = vunpack.c.l.b16 %v125
    %v165 = vunpack.c.l.b16 %v126
    %v166 = vunpack.c.l.b16 %v127
    %v167 = vunpack.c.l.b16 %v128
    %v168 = vpack.c.b16 %v153, %v152
    %v169 = vpack.c.b16 %v155, %v154
    %v170 = vpack.c.b16 %v157, %v156
    %v171 = vpack.c.b16 %v159, %v158
    %v172 = vpack.c.b16 %v161, %v160
    %v173 = vpack.c.b16 %v163, %v162
    %v174 = vpack.c.b16 %v165, %v164
    %v175 = vpack.c.b16 %v167, %v166
    %184 = vmatpush.bf16.msra.mxu0 %v175
    %185 = vmatpush.bf16.msra.mxu0 %v174
    %186 = vmatpush.bf16.msra.mxu0 %v173
    %187 = vmatpush.bf16.msra.mxu0 %v172
    %188 = vmatpush.bf16.msra.mxu0 %v171
    %189 = vmatpush.bf16.msra.mxu0 %v170
    %190 = vmatpush.bf16.msra.mxu0 %v169
    %191 = vmatpush.bf16.msra.mxu0 %v168
    %192 = vmatmul.bf16.gmra.mxu0 %v134
    %v193 = vpop.f32.mrf.mxu0
    %v194 = vadd.f32 0.0, %v193
    %v195 = vpop.f32.mrf.mxu0
    %v196 = vadd.f32 0.0, %v195
    %197 = vdwg.mxu0
    %v198 = vpack.c.bf16 %v196, %v194
    %v200 = vperm.slane %v129, 0
    %v204 = vunpack.c.l.b16 %v109
    %v205 = vunpack.c.l.b16 %v110
    %v206 = vpack.c.b16 %v205, %v204
    %vm207 = vcmask 130048
    %v209 = vsel %vm207, %v206, 0
    %211 = vmatpush.bf16.msra.mxu0 0
    %212 = vmatpush.bf16.msra.mxu0 0
    %213 = vmatpush.bf16.msra.mxu0 0
    %214 = vmatpush.bf16.msra.mxu0 0
    %215 = vmatpush.bf16.msra.mxu0 0
    %216 = vmatpush.bf16.msra.mxu0 0
    %217 = vmatpush.bf16.msra.mxu0 0
    %218 = vmatpush.bf16.msra.mxu0 %v198
    %219 = vmatmul.bf16.gmra.mxu0 %v209
    %v220 = vpop.f32.mrf.mxu0
    %v221 = vadd.f32 %v200, %v220
    %v222 = vpop.f32.mrf.mxu0
    %v223 = vadd.f32 %v200, %v222
    %224 = vdwg.mxu0
    %v225 = vmax.f32 %v221, 0.0
    %v226 = vmax.f32 %v223, 0.0
    %v227 = vpack.c.bf16 %v226, %v225
    %v228 = vld [vmem:[#allocation8] sm:$0xf]
    %v229 = vld [vmem:[#allocation8 + $0x4] sm:$0xf]
    %v230 = vld [vmem:[#allocation8 + $0x8] sm:$0xf]
    %v231 = vld [vmem:[#allocation8 + $0xc] sm:$0xf]
    %v232 = vld [vmem:[#allocation8 + $0x10] sm:$0xf]
    %v233 = vld [vmem:[#allocation8 + $0x14] sm:$0xf]
    %v234 = vld [vmem:[#allocation8 + $0x18] sm:$0xf]
    %v235 = vld [vmem:[#allocation8 + $0x1c] sm:$0xf]
    %v236 = vld [vmem:[#allocation8 + $0x20] sm:$0xf]
    %v237 = vld [vmem:[#allocation8 + $0x24] sm:$0xf]
    %v238 = vld [vmem:[#allocation8 + $0x28] sm:$0xf]
    %v239 = vld [vmem:[#allocation8 + $0x2c] sm:$0xf]
    %v240 = vld [vmem:[#allocation8 + $0x30] sm:$0xf]
    %v241 = vld [vmem:[#allocation8 + $0x34] sm:$0xf]
    %v242 = vld [vmem:[#allocation8 + $0x38] sm:$0xf]
    %v243 = vld [vmem:[#allocation8 + $0x3c] sm:$0xf]
    %v244 = vld [vmem:[%s5] sm:$0x1]
    %v261 = vunpack.c.l.b16 %v228
    %v262 = vunpack.c.l.b16 %v229
    %v263 = vunpack.c.l.b16 %v230
    %v264 = vunpack.c.l.b16 %v231
    %v265 = vunpack.c.l.b16 %v232
    %v266 = vunpack.c.l.b16 %v233
    %v267 = vunpack.c.l.b16 %v234
    %v268 = vunpack.c.l.b16 %v235
    %v269 = vunpack.c.l.b16 %v236
    %v270 = vunpack.c.l.b16 %v237
    %v271 = vunpack.c.l.b16 %v238
    %v272 = vunpack.c.l.b16 %v239
    %v273 = vunpack.c.l.b16 %v240
    %v274 = vunpack.c.l.b16 %v241
    %v275 = vunpack.c.l.b16 %v242
    %v276 = vunpack.c.l.b16 %v243
    %v277 = vpack.c.b16 %v262, %v261
    %v278 = vpack.c.b16 %v264, %v263
    %v279 = vpack.c.b16 %v266, %v265
    %v280 = vpack.c.b16 %v268, %v267
    %v281 = vpack.c.b16 %v270, %v269
    %v282 = vpack.c.b16 %v272, %v271
    %v283 = vpack.c.b16 %v274, %v273
    %v284 = vpack.c.b16 %v276, %v275
    %293 = vmatpush.bf16.msra.mxu0 %v284
    %294 = vmatpush.bf16.msra.mxu0 %v283
    %295 = vmatpush.bf16.msra.mxu0 %v282
    %296 = vmatpush.bf16.msra.mxu0 %v281
    %297 = vmatpush.bf16.msra.mxu0 %v280
    %298 = vmatpush.bf16.msra.mxu0 %v279
    %299 = vmatpush.bf16.msra.mxu0 %v278
    %300 = vmatpush.bf16.msra.mxu0 %v277
    %301 = vmatmul.bf16.gmra.mxu0 %v227
    %v302 = vpop.f32.mrf.mxu0
    %v303 = vadd.f32 0.0, %v302
    %v304 = vpop.f32.mrf.mxu0
    %v305 = vadd.f32 0.0, %v304
    %306 = vdwg.mxu0
    %v307 = vpack.c.bf16 %v305, %v303
    %v309 = vperm.slane %v244, 0
    %311 = vmatpush.bf16.msra.mxu0 0
    %312 = vmatpush.bf16.msra.mxu0 0
    %313 = vmatpush.bf16.msra.mxu0 0
    %314 = vmatpush.bf16.msra.mxu0 0
    %315 = vmatpush.bf16.msra.mxu0 0
    %316 = vmatpush.bf16.msra.mxu0 0
    %317 = vmatpush.bf16.msra.mxu0 0
    %318 = vmatpush.bf16.msra.mxu0 %v307
    %319 = vmatmul.bf16.gmra.mxu0 %v209
    %v320 = vpop.f32.mrf.mxu0
    %v321 = vadd.f32 %v309, %v320
    %v322 = vpop.f32.mrf.mxu0
    %v323 = vadd.f32 %v309, %v322
    %324 = vdwg.mxu0
    %v325 = vmax.f32 %v321, 0.0
    %v326 = vmax.f32 %v323, 0.0
    %v327 = vpack.c.bf16 %v326, %v325
    %v328 = vld [vmem:[#allocation10] sm:$0xf]
    %v329 = vld [vmem:[#allocation10 + $0x4] sm:$0xf]
    %v330 = vld [vmem:[#allocation10 + $0x8] sm:$0xf]
    %v331 = vld [vmem:[#allocation10 + $0xc] sm:$0xf]
    %v332 = vld [vmem:[#allocation10 + $0x10] sm:$0xf]
    %v333 = vld [vmem:[#allocation10 + $0x14] sm:$0xf]
    %v334 = vld [vmem:[#allocation10 + $0x18] sm:$0xf]
    %v335 = vld [vmem:[#allocation10 + $0x1c] sm:$0xf]
    %v336 = vld [vmem:[#allocation10 + $0x20] sm:$0xf]
    %v337 = vld [vmem:[#allocation10 + $0x24] sm:$0xf]
    %v338 = vld [vmem:[#allocation10 + $0x28] sm:$0xf]
    %v339 = vld [vmem:[#allocation10 + $0x2c] sm:$0xf]
    %v340 = vld [vmem:[#allocation10 + $0x30] sm:$0xf]
    %v341 = vld [vmem:[#allocation10 + $0x34] sm:$0xf]
    %v342 = vld [vmem:[#allocation10 + $0x38] sm:$0xf]
    %v343 = vld [vmem:[#allocation10 + $0x3c] sm:$0xf]
    %v344 = vld [vmem:[%s7] sm:$0x1]
    %v361 = vunpack.c.l.b16 %v328
    %v362 = vunpack.c.l.b16 %v329
    %v363 = vunpack.c.l.b16 %v330
    %v364 = vunpack.c.l.b16 %v331
    %v365 = vunpack.c.l.b16 %v332
    %v366 = vunpack.c.l.b16 %v333
    %v367 = vunpack.c.l.b16 %v334
    %v368 = vunpack.c.l.b16 %v335
    %v369 = vunpack.c.l.b16 %v336
    %v370 = vunpack.c.l.b16 %v337
    %v371 = vunpack.c.l.b16 %v338
    %v372 = vunpack.c.l.b16 %v339
    %v373 = vunpack.c.l.b16 %v340
    %v374 = vunpack.c.l.b16 %v341
    %v375 = vunpack.c.l.b16 %v342
    %v376 = vunpack.c.l.b16 %v343
    %v377 = vpack.c.b16 %v362, %v361
    %v378 = vpack.c.b16 %v364, %v363
    %v379 = vpack.c.b16 %v366, %v365
    %v380 = vpack.c.b16 %v368, %v367
    %v381 = vpack.c.b16 %v370, %v369
    %v382 = vpack.c.b16 %v372, %v371
    %v383 = vpack.c.b16 %v374, %v373
    %v384 = vpack.c.b16 %v376, %v375
    %393 = vmatpush.bf16.msra.mxu0 %v384
    %394 = vmatpush.bf16.msra.mxu0 %v383
    %395 = vmatpush.bf16.msra.mxu0 %v382
    %396 = vmatpush.bf16.msra.mxu0 %v381
    %397 = vmatpush.bf16.msra.mxu0 %v380
    %398 = vmatpush.bf16.msra.mxu0 %v379
    %399 = vmatpush.bf16.msra.mxu0 %v378
    %400 = vmatpush.bf16.msra.mxu0 %v377
    %401 = vmatmul.bf16.gmra.mxu0 %v327
    %v402 = vpop.f32.mrf.mxu0
    %v403 = vadd.f32 0.0, %v402
    %v404 = vpop.f32.mrf.mxu0
    %v405 = vadd.f32 0.0, %v404
    %406 = vdwg.mxu0
    %v407 = vpack.c.bf16 %v405, %v403
    %v409 = vperm.slane %v344, 0
    %411 = vmatpush.bf16.msra.mxu0 0
    %412 = vmatpush.bf16.msra.mxu0 0
    %413 = vmatpush.bf16.msra.mxu0 0
    %414 = vmatpush.bf16.msra.mxu0 0
    %415 = vmatpush.bf16.msra.mxu0 0
    %416 = vmatpush.bf16.msra.mxu0 0
    %417 = vmatpush.bf16.msra.mxu0 0
    %418 = vmatpush.bf16.msra.mxu0 %v407
    %419 = vmatmul.bf16.gmra.mxu0 %v209
    %v420 = vpop.f32.mrf.mxu0
    %v421 = vadd.f32 %v409, %v420
    %v422 = vpop.f32.mrf.mxu0
    %v423 = vadd.f32 %v409, %v422
    %424 = vdwg.mxu0
    %v425 = vmax.f32 %v421, 0.0
    %v426 = vmax.f32 %v423, 0.0
    %v427 = vlaneseq
    %v428 = vand.u32 %v427, 127
    %vm429 = vcmp.lt.s32.totalorder %v428, 4
    %v430 = vsel %vm429, %v425, -1e+30
    %v431 = vsel %vm429, %v426, -1e+30
    %432 = vmax.xlane.f32.xlu0 %v430
    %v433 = vpop.xlane.xlu0 %432
    %434 = vmax.xlane.f32.xlu0 %v431
    %v435 = vpop.xlane.xlu0 %434
    %v436 = vsub.f32 %v430, %v433
    %v437 = vsub.f32 %v431, %v435
    %v438 = vmul.f32 %v436, 1.442695
    %v439 = vpow.pop %v438
    %v440 = vmul.f32 %v437, 1.442695
    %v441 = vpow.pop %v440
    %442 = vadd.xlane.f32.xlu0 %v439
    %v443 = vpop.xlane.xlu0 %442
    %444 = vadd.xlane.f32.xlu0 %v441
    %v445 = vpop.xlane.xlu0 %444
    %v446 = vrcp.pop %v443
    %v447 = vrcp.pop %v445
    %v448 = vmul.f32 %v439, %v446
    %v449 = vmul.f32 %v441, %v447
    %450 = vst [vmem:[#allocation11] sm:$0xff] %v448
    %451 = vst [vmem:[#allocation11 + $0x8] sm:$0xff] %v449
    // Predicated region
    $region54: #{tpu_custom_call.1} parent=1 // pred_check
      _
    $region55: #{tpu_custom_call.1} parent=1 // pred_check_branch
      %453 = sbr.rel (0) target = $region57
    $region56: #{tpu_custom_call.1} parent=1 // pred_region
      %455 = vsyncadd [#allocation4], 0
      %s456 = sshll.u32 [#allocation11], 4
      %s457 = int_to_ptr.vmem [resolvable:$true] %s456
      %s458 = sshll.u32 %s8, 4
      %s459 = int_to_ptr.hbm [resolvable:$true] %s458
      %464 = dma.vmem_to_hbm [thread:$0]  %s457, 256, %s459, [#allocation4], 128, 128, 8
    $region57: #{tpu_custom_call.1} parent=1 // pred_fallthru
      _
    // Predicated region
    $region58: #{tpu_custom_call.1} parent=1 // pred_check
      _
    $region59: #{tpu_custom_call.1} parent=1 // pred_check_branch
      %466 = sbr.rel (0) target = $region61
    $region60: #{tpu_custom_call.1} parent=1 // pred_region
      %468 = dma.done [#allocation4], 256
    $region61: #{tpu_custom_call.1} parent=1 // pred_fallthru
      _
    %469 = vsyncpa [#allocation3], 1
    %470 = vsyncpa [#allocation6], 1
    %471 = vsyncpa [#allocation9], 1
    %472 = vsyncpa [#allocation4], 1

</llo_original>
